<compile_context>
chip_gen: v6e
topology: v6e:2x2x1
jax: 0.10.0
libtpu: 0.0.40
codegen_flags: <defaults>
</compile_context>

<pallas_src>
import functools

import jax
import jax.numpy as jnp
from jax import lax
from jax.experimental import pallas as pl
from jax.experimental.pallas import tpu as pltpu


def _round_up(x: int, m: int) -> int:
    return ((x + m - 1) // m) * m


def _softmaxplus_kernel(seq_len, ts_chunk, beta_ref, c_ref, out_ref, carry_ref):
    """
    seq_len  : static int, true S (for masking ragged tail lanes)
    ts_chunk : static int, scan chunk width (128 -> single-vreg lane rolls)
    beta_ref : (1,) f32 scalar-prefetch (SMEM)
    c_ref    : (TB, TS_BLOCK) input tile in the original dtype (VMEM)
    out_ref  : (TB, TS_BLOCK) output tile in the original dtype (VMEM)
    carry_ref: (TB, 1) f32 running-sum carry across S blocks (VMEM scratch)
    """
    j = pl.program_id(1)  # S (carry) axis -- last grid axis, sequential

    @pl.when(j == 0)
    def _init():
        carry_ref[...] = jnp.zeros_like(carry_ref)

    beta = beta_ref[0]
    inv_beta = 1.0 / beta

    tb, ts_block = out_ref.shape
    n_chunks = ts_block // ts_chunk
    s_base = j * ts_block  # global S offset of this block

    # Lane index within a chunk; computed once and reused (hoisted out of the
    # chunk loop -- broadcast_in_dim is not CSE'd by JAX).
    lane = lax.broadcasted_iota(jnp.int32, (tb, ts_chunk), 1)

    carry = carry_ref[...]  # (TB, 1) f32

    for k in range(n_chunks):  # static unroll; slices are 128-lane aligned
        x = c_ref[:, pl.ds(k * ts_chunk, ts_chunk)].astype(jnp.float32)
        x = beta * x
        # Numerically stable softplus: softplus(x) = max(x, 0) + log1p(exp(-|x|))
        sp = (jnp.maximum(x, 0.0) + jnp.log1p(jnp.exp(-jnp.abs(x)))) * inv_beta
        # Zero the lanes beyond the true sequence length (ragged last S tile):
        # stale VMEM there must not leak into the prefix sum / carry.
        sp = jnp.where(s_base + k * ts_chunk + lane < seq_len, sp, 0.0)

        # Inclusive prefix sum along lanes: Hillis-Steele scan with XLU rotates.
        # rolled[:, l] == csum[:, l - shift]; wrapped lanes (l < shift) masked.
        csum = sp
        shift = 1
        while shift < ts_chunk:
            rolled = pltpu.roll(csum, shift, axis=1)
            csum = csum + jnp.where(lane >= shift, rolled, 0.0)
            shift *= 2

        delta = csum + carry  # broadcast running sum over the chunk
        out_ref[:, pl.ds(k * ts_chunk, ts_chunk)] = delta.astype(out_ref.dtype)
        carry = delta[:, ts_chunk - 1:ts_chunk]  # last column -> next chunk

    carry_ref[...] = carry


@jax.jit
def softmax_plus(c: jax.Array, beta: jax.Array) -> jax.Array:
    """c: (B, S) float array, beta: scalar -> (B, S) delta, same dtype as c."""
    B, S = c.shape

    TS_CHUNK = 128                                   # scan width (1 vreg of lanes)
    TB = min(_round_up(B, 8), 256)                   # sublane tile (multiple of 8)
    TS_BLOCK = min(_round_up(S, TS_CHUNK), 2048)     # wide lane-dense DMA tile

    grid = (pl.cdiv(B, TB), pl.cdiv(S, TS_BLOCK))    # ragged edges handled in-kernel

    beta_arr = jnp.reshape(jnp.asarray(beta, dtype=jnp.float32), (1,))
    kernel = functools.partial(_softmaxplus_kernel, S, TS_CHUNK)

    return pl.pallas_call(
        kernel,
        out_shape=jax.ShapeDtypeStruct((B, S), c.dtype),
        grid_spec=pltpu.PrefetchScalarGridSpec(
            num_scalar_prefetch=1,                   # beta -> SMEM
            grid=grid,
            in_specs=[
                pl.BlockSpec((TB, TS_BLOCK), lambda i, j, beta_ref: (i, j)),
            ],
            out_specs=pl.BlockSpec((TB, TS_BLOCK), lambda i, j, beta_ref: (i, j)),
            scratch_shapes=[pltpu.VMEM((TB, 1), jnp.float32)],  # S carry
        ),
        compiler_params=pltpu.CompilerParams(
            dimension_semantics=("parallel", "arbitrary"),      # B || , S sequential
            vmem_limit_bytes=32 * 1024 * 1024,
        ),
    )(beta_arr, c)


def _reference(c, beta):
    """Pure-JAX port of the PyTorch forward (sequential logsumexp recurrence)."""
    def step(delta_prev, c_i):
        z = jnp.stack([delta_prev, c_i + delta_prev], axis=0)
        delta = (1.0 / beta) * jax.nn.logsumexp(beta * z, axis=0)
        return delta, delta

    init = jnp.zeros((c.shape[0],), dtype=c.dtype)
    _, outs = lax.scan(step, init, jnp.transpose(c))
    return jnp.transpose(outs)


if __name__ == "__main__":
    beta = jnp.float32(10.0)  # module's default init of the trainable scalar

    # Small shape matching the module's forward: c is (B, S).
    key = jax.random.PRNGKey(0)
    B, S = 2, 8
    c = jax.random.normal(key, (B, S), dtype=jnp.float32)
    out = jax.block_until_ready(softmax_plus(c, beta))
    ref = _reference(c, beta)
    assert out.shape == (B, S) and out.dtype == c.dtype
    assert jnp.allclose(out, ref, atol=1e-4, rtol=1e-5), float(jnp.max(jnp.abs(out - ref)))

    # Ragged B and S, many 128-lane chunks and two S grid blocks: exercises the
    # in-kernel tail mask and the VMEM carry across chunks / grid steps.
    key2 = jax.random.PRNGKey(1)
    B2, S2 = 10, 2300
    c2 = jax.random.normal(key2, (B2, S2), dtype=jnp.float32)
    out2 = jax.block_until_ready(softmax_plus(c2, beta))
    ref2 = _reference(c2, beta)
    assert out2.shape == (B2, S2)
    rel_err = jnp.max(jnp.abs(out2 - ref2) / (1.0 + jnp.abs(ref2)))
    assert rel_err < 1e-3, float(rel_err)

    print("KERNEL_OK")
</pallas_src>

<mosaic_0001>
module attributes {stable_mosaic.version = 11 : i64} {
  func.func @_softmaxplus_kernel(%arg0: i32, %arg1: i32, %arg2: memref<1xf32, #tpu.memory_space<smem>>, %arg3: memref<8x128xf32, #tpu.memory_space<vmem>>, %arg4: memref<8x128xf32, #tpu.memory_space<vmem>>, %arg5: memref<8x1xf32, #tpu.memory_space<vmem>>) attributes {dimension_semantics = [#tpu.dimension_semantics<parallel>, #tpu.dimension_semantics<arbitrary>], iteration_bounds = array<i64: 1, 1>, scalar_prefetch = 1 : i64, scratch_operands = 1 : i64, tpu.core_type = #tpu.core_type<tc>, window_params = [{transform_indices = @transform_0, window_bounds = array<i64: 8, 128>}, {transform_indices = @transform_1, window_bounds = array<i64: 8, 128>}]} {
    %c0_i32 = arith.constant 0 : i32
    %0 = arith.cmpi eq, %arg1, %c0_i32 : i32
    %1 = arith.extui %0 : i1 to i32
    %c0_i32_0 = arith.constant 0 : i32
    %2 = arith.cmpi ne, %1, %c0_i32_0 : i32
    scf.if %2 {
      %cst_28 = arith.constant 0.000000e+00 : f32
      %75 = vector.broadcast %cst_28 : f32 to vector<8x1xf32>
      %c0_29 = arith.constant 0 : index
      %c0_30 = arith.constant 0 : index
      %76 = vector.load %arg5[%c0_29, %c0_30] : memref<8x1xf32, #tpu.memory_space<vmem>>, vector<8x1xf32>
      tpu.vector_store %arg5[%c0_29, %c0_30], %75 {strides = array<i32>} : memref<8x1xf32, #tpu.memory_space<vmem>>, vector<8x1xf32>,
    } else {
    }
    %c0 = arith.constant 0 : index
    %3 = memref.load %arg2[%c0] : memref<1xf32, #tpu.memory_space<smem>>
    %cst = arith.constant 1.000000e+00 : f32
    %4 = arith.divf %cst, %3 : f32
    %c128_i32 = arith.constant 128 : i32
    %5 = arith.muli %arg1, %c128_i32 : i32
    %6 = tpu.iota {dimensions = array<i32: 1>} : vector<8x128xi32>
    %c0_1 = arith.constant 0 : index
    %c0_2 = arith.constant 0 : index
    %7 = vector.load %arg5[%c0_1, %c0_2] : memref<8x1xf32, #tpu.memory_space<vmem>>, vector<8x1xf32>
    %c0_3 = arith.constant 0 : index
    %c0_4 = arith.constant 0 : index
    %8 = vector.load %arg3[%c0_3, %c0_4] : memref<8x128xf32, #tpu.memory_space<vmem>>, vector<8x128xf32>
    %9 = vector.broadcast %3 : f32 to vector<8x128xf32>
    %10 = arith.mulf %9, %8 : vector<8x128xf32>
    %cst_5 = arith.constant 0.000000e+00 : f32
    %11 = vector.broadcast %cst_5 : f32 to vector<8x128xf32>
    %12 = arith.maximumf %10, %11 : vector<8x128xf32>
    %13 = math.absf %10 : vector<8x128xf32>
    %cst_6 = arith.constant 0.000000e+00 : f32
    %14 = vector.broadcast %cst_6 : f32 to vector<8x128xf32>
    %15 = arith.subf %14, %13 : vector<8x128xf32>
    %16 = math.exp %15 : vector<8x128xf32>
    %17 = math.log1p %16 : vector<8x128xf32>
    %18 = arith.addf %12, %17 : vector<8x128xf32>
    %19 = vector.broadcast %4 : f32 to vector<8x128xf32>
    %20 = arith.mulf %18, %19 : vector<8x128xf32>
    %c0_i32_7 = arith.constant 0 : i32
    %21 = arith.addi %5, %c0_i32_7 : i32
    %22 = vector.broadcast %21 : i32 to vector<8x128xi32>
    %23 = arith.addi %22, %6 : vector<8x128xi32>
    %c8_i32 = arith.constant 8 : i32
    %24 = vector.broadcast %c8_i32 : i32 to vector<8x128xi32>
    %25 = arith.cmpi slt, %23, %24 : vector<8x128xi32>
    %cst_8 = arith.constant 0.000000e+00 : f32
    %26 = vector.broadcast %cst_8 : f32 to vector<8x128xf32>
    %27 = arith.select %25, %20, %26 : vector<8x128xi1>, vector<8x128xf32>
    %c1_i32 = arith.constant 1 : i32
    %28 = tpu.dynamic_rotate %27 by %c1_i32 dim 1 : vector<8x128xf32>, i32 -> vector<8x128xf32>
    %c1_i32_9 = arith.constant 1 : i32
    %29 = vector.broadcast %c1_i32_9 : i32 to vector<8x128xi32>
    %30 = arith.cmpi sge, %6, %29 : vector<8x128xi32>
    %cst_10 = arith.constant 0.000000e+00 : f32
    %31 = vector.broadcast %cst_10 : f32 to vector<8x128xf32>
    %32 = arith.select %30, %28, %31 : vector<8x128xi1>, vector<8x128xf32>
    %33 = arith.addf %27, %32 : vector<8x128xf32>
    %c2_i32 = arith.constant 2 : i32
    %34 = tpu.dynamic_rotate %33 by %c2_i32 dim 1 : vector<8x128xf32>, i32 -> vector<8x128xf32>
    %c2_i32_11 = arith.constant 2 : i32
    %35 = vector.broadcast %c2_i32_11 : i32 to vector<8x128xi32>
    %36 = arith.cmpi sge, %6, %35 : vector<8x128xi32>
    %cst_12 = arith.constant 0.000000e+00 : f32
    %37 = vector.broadcast %cst_12 : f32 to vector<8x128xf32>
    %38 = arith.select %36, %34, %37 : vector<8x128xi1>, vector<8x128xf32>
    %39 = arith.addf %33, %38 : vector<8x128xf32>
    %c4_i32 = arith.constant 4 : i32
    %40 = tpu.dynamic_rotate %39 by %c4_i32 dim 1 : vector<8x128xf32>, i32 -> vector<8x128xf32>
    %c4_i32_13 = arith.constant 4 : i32
    %41 = vector.broadcast %c4_i32_13 : i32 to vector<8x128xi32>
    %42 = arith.cmpi sge, %6, %41 : vector<8x128xi32>
    %cst_14 = arith.constant 0.000000e+00 : f32
    %43 = vector.broadcast %cst_14 : f32 to vector<8x128xf32>
    %44 = arith.select %42, %40, %43 : vector<8x128xi1>, vector<8x128xf32>
    %45 = arith.addf %39, %44 : vector<8x128xf32>
    %c8_i32_15 = arith.constant 8 : i32
    %46 = tpu.dynamic_rotate %45 by %c8_i32_15 dim 1 : vector<8x128xf32>, i32 -> vector<8x128xf32>
    %c8_i32_16 = arith.constant 8 : i32
    %47 = vector.broadcast %c8_i32_16 : i32 to vector<8x128xi32>
    %48 = arith.cmpi sge, %6, %47 : vector<8x128xi32>
    %cst_17 = arith.constant 0.000000e+00 : f32
    %49 = vector.broadcast %cst_17 : f32 to vector<8x128xf32>
    %50 = arith.select %48, %46, %49 : vector<8x128xi1>, vector<8x128xf32>
    %51 = arith.addf %45, %50 : vector<8x128xf32>
    %c16_i32 = arith.constant 16 : i32
    %52 = tpu.dynamic_rotate %51 by %c16_i32 dim 1 : vector<8x128xf32>, i32 -> vector<8x128xf32>
    %c16_i32_18 = arith.constant 16 : i32
    %53 = vector.broadcast %c16_i32_18 : i32 to vector<8x128xi32>
    %54 = arith.cmpi sge, %6, %53 : vector<8x128xi32>
    %cst_19 = arith.constant 0.000000e+00 : f32
    %55 = vector.broadcast %cst_19 : f32 to vector<8x128xf32>
    %56 = arith.select %54, %52, %55 : vector<8x128xi1>, vector<8x128xf32>
    %57 = arith.addf %51, %56 : vector<8x128xf32>
    %c32_i32 = arith.constant 32 : i32
    %58 = tpu.dynamic_rotate %57 by %c32_i32 dim 1 : vector<8x128xf32>, i32 -> vector<8x128xf32>
    %c32_i32_20 = arith.constant 32 : i32
    %59 = vector.broadcast %c32_i32_20 : i32 to vector<8x128xi32>
    %60 = arith.cmpi sge, %6, %59 : vector<8x128xi32>
    %cst_21 = arith.constant 0.000000e+00 : f32
    %61 = vector.broadcast %cst_21 : f32 to vector<8x128xf32>
    %62 = arith.select %60, %58, %61 : vector<8x128xi1>, vector<8x128xf32>
    %63 = arith.addf %57, %62 : vector<8x128xf32>
    %c64_i32 = arith.constant 64 : i32
    %64 = tpu.dynamic_rotate %63 by %c64_i32 dim 1 : vector<8x128xf32>, i32 -> vector<8x128xf32>
    %c64_i32_22 = arith.constant 64 : i32
    %65 = vector.broadcast %c64_i32_22 : i32 to vector<8x128xi32>
    %66 = arith.cmpi sge, %6, %65 : vector<8x128xi32>
    %cst_23 = arith.constant 0.000000e+00 : f32
    %67 = vector.broadcast %cst_23 : f32 to vector<8x128xf32>
    %68 = arith.select %66, %64, %67 : vector<8x128xi1>, vector<8x128xf32>
    %69 = arith.addf %63, %68 : vector<8x128xf32>
    %70 = vector.broadcast %7 : vector<8x1xf32> to vector<8x128xf32>
    %71 = arith.addf %69, %70 : vector<8x128xf32>
    %c0_24 = arith.constant 0 : index
    %c0_25 = arith.constant 0 : index
    %72 = vector.load %arg4[%c0_24, %c0_25] : memref<8x128xf32, #tpu.memory_space<vmem>>, vector<8x128xf32>
    tpu.vector_store %arg4[%c0_24, %c0_25], %71 {strides = array<i32>} : memref<8x128xf32, #tpu.memory_space<vmem>>, vector<8x128xf32>,
    %73 = vector.extract_strided_slice %71 {offsets = [0, 127], sizes = [8, 1], strides = [1, 1]} : vector<8x128xf32> to vector<8x1xf32>
    %c0_26 = arith.constant 0 : index
    %c0_27 = arith.constant 0 : index
    %74 = vector.load %arg5[%c0_26, %c0_27] : memref<8x1xf32, #tpu.memory_space<vmem>>, vector<8x1xf32>
    tpu.vector_store %arg5[%c0_26, %c0_27], %73 {strides = array<i32>} : memref<8x1xf32, #tpu.memory_space<vmem>>, vector<8x1xf32>,
    return
  }
  func.func @transform_0(%arg0: i32, %arg1: i32, %arg2: memref<1xf32, #tpu.memory_space<smem>>) -> (i32, i32) {
    %c0_i32 = arith.constant 0 : i32
    return %arg0, %arg1 : i32, i32
  }
  func.func @transform_1(%arg0: i32, %arg1: i32, %arg2: memref<1xf32, #tpu.memory_space<smem>>) -> (i32, i32) {
    %c0_i32 = arith.constant 0 : i32
    return %arg0, %arg1 : i32, i32
  }
}

</mosaic_0001>

<llo_original>
// kernel: softmax_plus.1
$region0: #{softmax_plus.1}
  #allocation0 [shape = 'u32[]', space=smem, size = 0x4, offset = 0x4, fixed_abs, tag = 'smem constant byte address 0x4 - core index']
  #allocation1 [shape = 'u32[144,128]{1,0:T(1,128)}', space=vmem, size = 0x12000, scoped, tag = 'internal scratch']
  #allocation2 [shape = 'f32[8,1]{1,0:T(8,128)}', space=vmem, size = 0x1000, scoped, tag = 'scratch operand']
  #allocation3 [shape = 's32[1]{0}', space=sflag, size = 0x4, scoped, tag = 'scoped memory for softmax_plus.1']
  #allocation4 [shape = 'f32[1]{0:T(128)S(6)}', space=smem, size = 0x200, scoped, tag = 'prefetched SMEM operand 0']
  %s0 = inlined_call_operand.<no memory space> [shape: f32[1], index: 0, kind: input, shape index: {}]
  %s1 = inlined_call_operand.vmem [shape: f32[2,8], index: 1, kind: input, shape index: {}]
  %s2 = inlined_call_operand.hbm [shape: f32[2,8], index: 2, kind: output, shape index: {}]
  %s3 = sld [smem:[#allocation0]]
  $region18: #{softmax_plus.1} parent=0
    _
  %s5 = ssub.s32 1, %s3
  %s6 = scalar_select 0, %s5, %s3
  %7 = sst [smem:[#allocation4]] %s0
  $region1: #{softmax_plus.1} parent=0
    #allocation5 [shape = 'u8[4096]{0}', space=vmem, size = 0x1000, scoped, tag = 'output window, operand 0, single buffered']
    #allocation6 [shape = 's32[1]{0}', space=sflag, size = 0x4, scoped, tag = 'scoped memory for softmax_plus.1']
    %8 = vsyncpa [#allocation6], 0
    // Predicated region
    $region2: #{softmax_plus.1} parent=1 // pred_check
      _
    $region3: #{softmax_plus.1} parent=1 // pred_check_branch
      %10 = sbr.rel (0) target = $region5
    $region4: #{softmax_plus.1} parent=1 // pred_region
      _
    $region5: #{softmax_plus.1} parent=1 // pred_fallthru
      _
    %p11 = scmp.eq.s32.totalorder 0, 0
    // Predicated region
    $region6: #{softmax_plus.1} parent=1 // pred_check
      %p12 = pneg %p11
    $region7: #{softmax_plus.1} parent=1 // pred_check_branch
      %14 = sbr.rel (%p12) target = $region9
    $region8: #{softmax_plus.1} parent=1 // pred_region
      %vm15 = vcmask 7168
      %16 = vst.msk [vmem:[#allocation2] sm:$0xff] %vm15, 0.0
    $region9: #{softmax_plus.1} parent=1 // pred_fallthru
      _
    %s17 = sld [smem:[#allocation4]]
    %v18 = vstv %s17
    %v19 = vrcp.pop %v18
    %s20 = vtos %v19
    %s21 = smul.u32 0, 128
    %v22 = vlaneseq
    %v23 = vand.u32 %v22, 127
    %v24 = vld [vmem:[#allocation2] sm:$0xff]
    %v25 = vld [vmem:[%s1] sm:$0xff]
    %v26 = vstv %s17
    %v27 = vmul.f32 %v26, %v25
    %v28 = vmax.f32 %v27, 0.0
    %v29 = vand.u32 2147483647, %v27
    %v30 = vsub.f32 0.0, %v29
    %v31 = vmul.f32 %v30, 1.442695
    %v32 = vpow.pop %v31
    %v33 = vadd.f32 %v32, 1.0
    %v34 = vlog2.pop %v33
    %v35 = vmul.f32 %v34, 0.6931472
    %v36 = vmul.f32 -0.5, %v32
    %v37 = vadd.f32 %v36, 1.0
    %v38 = vmul.f32 %v37, %v32
    %v39 = vand.u32 2147483647, %v32
    %vm40 = vcmp.lt.f32.partialorder %v39, 0.0004427343
    %v41 = vsel %vm40, %v38, %v35
    %v42 = vadd.f32 %v28, %v41
    %v43 = vstv %s20
    %v44 = vmul.f32 %v42, %v43
    %v45 = vstv %s21
    %v46 = vadd.s32 %v45, %v23
    %vm47 = vcmp.lt.s32.totalorder %v46, 8
    %v48 = vsel %vm47, %v44, 0.0
    %49 = vrot.lane.b32.xlu0 %v48, 1
    %v50 = vpop.permute.xlu0 %49
    %vm51 = vcmp.ge.s32.totalorder %v23, 1
    %v52 = vsel %vm51, %v50, 0.0
    %v53 = vadd.f32 %v48, %v52
    %54 = vrot.lane.b32.xlu0 %v53, 2
    %v55 = vpop.permute.xlu0 %54
    %vm56 = vcmp.ge.s32.totalorder %v23, 2
    %v57 = vsel %vm56, %v55, 0.0
    %v58 = vadd.f32 %v53, %v57
    %59 = vrot.lane.b32.xlu0 %v58, 4
    %v60 = vpop.permute.xlu0 %59
    %vm61 = vcmp.ge.s32.totalorder %v23, 4
    %v62 = vsel %vm61, %v60, 0.0
    %v63 = vadd.f32 %v58, %v62
    %64 = vrot.lane.b32.xlu0 %v63, 8
    %v65 = vpop.permute.xlu0 %64
    %vm66 = vcmp.ge.s32.totalorder %v23, 8
    %v67 = vsel %vm66, %v65, 0.0
    %v68 = vadd.f32 %v63, %v67
    %69 = vrot.lane.b32.xlu0 %v68, 16
    %v70 = vpop.permute.xlu0 %69
    %vm71 = vcmp.ge.s32.totalorder %v23, 16
    %v72 = vsel %vm71, %v70, 0.0
    %v73 = vadd.f32 %v68, %v72
    %74 = vrot.lane.b32.xlu0 %v73, 32
    %v75 = vpop.permute.xlu0 %74
    %vm76 = vcmp.ge.s32.totalorder %v23, 32
    %v77 = vsel %vm76, %v75, 0.0
    %v78 = vadd.f32 %v73, %v77
    %79 = vrot.lane.b32.xlu0 %v78, 64
    %v80 = vpop.permute.xlu0 %79
    %vm81 = vcmp.ge.s32.totalorder %v23, 64
    %v82 = vsel %vm81, %v80, 0.0
    %v83 = vadd.f32 %v78, %v82
    %85 = vset.pattern.permute.xlu0 0
    %86 = vperm.xlu0 %85, %v24
    %v87 = vpop.permute.xlu0 %86
    %v89 = vadd.f32 %v83, %v87
    %90 = vst [vmem:[#allocation5] sm:$0xff] %v89
    %92 = vrot.lane.b32.xlu0 %v89, 1
    %v93 = vpop.permute.xlu0 %92
    %vm95 = vcmask 7168
    %96 = vst.msk [vmem:[#allocation2] sm:$0xff] %vm95, %v93
    // Predicated region
    $region10: #{softmax_plus.1} parent=1 // pred_check
      _
    $region11: #{softmax_plus.1} parent=1 // pred_check_branch
      %98 = sbr.rel (0) target = $region13
    $region12: #{softmax_plus.1} parent=1 // pred_region
      %s100 = ssub.s32 128, 32
      %101 = vsyncadd [#allocation6], %s100
      %s102 = sshll.u32 [#allocation5], 4
      %s103 = int_to_ptr.vmem [resolvable:$true] %s102
      %108 = dma.vmem_to_hbm [thread:$0]  %s103, 32, %s2, [#allocation6], 32, 32, 2
    $region13: #{softmax_plus.1} parent=1 // pred_fallthru
      _
    // Predicated region
    $region14: #{softmax_plus.1} parent=1 // pred_check
      _
    $region15: #{softmax_plus.1} parent=1 // pred_check_branch
      %110 = sbr.rel (0) target = $region17
    $region16: #{softmax_plus.1} parent=1 // pred_region
      %111 = dma.done [#allocation6], 128
    $region17: #{softmax_plus.1} parent=1 // pred_fallthru
      _
    %112 = vsyncpa [#allocation6], 1

</llo_original>
